<compile_context>
chip_gen: v5e
topology: v5e:2x2
jax: 0.10.0
libtpu: 0.0.40
codegen_flags: <defaults>
</compile_context>

<pallas_src>
import numpy as np

import jax
import jax.numpy as jnp
from jax.experimental import pallas as pl
from jax.experimental.pallas import tpu as pltpu

_HIDDEN = 20   # fixed by Actor
_LANES = 128   # TPU lane width


def _pad8(n):
    return -(-n // 8) * 8


# ----------------------------------------------------------------------------
# Kernel
# ----------------------------------------------------------------------------
def _make_kernel(P, HP, r_w2, r_w3, A, apply_scale, use_tanh):
    """Fused 3-layer MLP; all slab offsets / widths are static.

    Zero-padding invariant: W1 columns >= H, W2/W3 padded rows, bias lanes
    >= H (or >= A for b3) are exactly 0, and relu(0)=0, so padded lanes stay 0
    through the whole network and out[:, :A] is exact.
    """

    def kernel(obs_ref, w_ref, b_ref, o_ref):
        # Resident parameter views (constant index_map -> loaded once).
        w1 = w_ref[0:P, :]                 # (P, 128)   lanes [0,H) valid
        w2 = w_ref[r_w2:r_w2 + HP, :]      # (HP, 128)  lanes [0,H) valid
        w3 = w_ref[r_w3:r_w3 + HP, :]      # (HP, 128)  lanes [0,A) valid
        b1 = b_ref[0:1, :]                 # (1, 128) f32
        b2 = b_ref[1:2, :]
        b3 = b_ref[2:3, :]

        obs = obs_ref[...]                 # (TB, P) f32 = [x | g]

        # l1: single lane-dense dot (concat eliminated upstream).
        h1 = jnp.dot(obs, w1, preferred_element_type=jnp.float32) + b1
        h1 = jnp.maximum(h1, 0.0)
        # l2 (K trimmed to HP=pad8(H) useful lanes).
        h2 = jnp.dot(h1[:, :HP], w2, preferred_element_type=jnp.float32) + b2
        h2 = jnp.maximum(h2, 0.0)
        # l3: only the A action lanes are kept past this point.
        a = jnp.dot(h2[:, :HP], w3, preferred_element_type=jnp.float32) + b3
        act = a[:, :A]                                  # (TB, A)
        if use_tanh:
            act = jnp.tanh(act)                         # max_action = 1
            if apply_scale:
                act = act * b_ref[3:4, :][:, :A]        # (1, A) f32 scale
        o_ref[...] = act.astype(o_ref.dtype)            # narrow (TB, A) store

    return kernel


# ----------------------------------------------------------------------------
# Parameter / input packing
# ----------------------------------------------------------------------------
def pack_params(params, state_dim, goal_dim, use_tanh=True):
    """Pack weights into one f32 (rows,128) slab + a tiny f32 bias/scale block.

    Slab rows (all region offsets multiples of 8, padding is exact zero):
      [0, P)              W1  (P = sd+gd rows, lanes [0,H))
      [r_w2, r_w2+HP)     W2  (lanes [0,H))
      [r_w3, r_w3+HP)     W3  (lanes [0,A))
    Bias block rows: 0=b1, 1=b2, 2=b3, 3=scale (broadcast over A lanes).
    """
    w1, b1, w2, b2, w3, b3, scale = params
    sd, gd = state_dim, goal_dim
    P = sd + gd
    H = w1.shape[1]
    A = w3.shape[1]
    assert w1.shape[0] == P and H <= _LANES and A <= _LANES

    HP = _pad8(H)
    r_w2 = _pad8(P)
    r_w3 = r_w2 + HP
    n_rows = _pad8(r_w3 + HP)

    slab = jnp.zeros((n_rows, _LANES), jnp.float32)
    slab = slab.at[0:P, 0:H].set(w1.astype(jnp.float32))
    slab = slab.at[r_w2:r_w2 + H, 0:H].set(w2.astype(jnp.float32))
    slab = slab.at[r_w3:r_w3 + H, 0:A].set(w3.astype(jnp.float32))

    biases = jnp.zeros((8, _LANES), jnp.float32)
    biases = biases.at[0, 0:H].set(jnp.reshape(b1, (-1,)).astype(jnp.float32))
    biases = biases.at[1, 0:H].set(jnp.reshape(b2, (-1,)).astype(jnp.float32))
    biases = biases.at[2, 0:A].set(jnp.reshape(b3, (-1,)).astype(jnp.float32))
    scale_vec = jnp.broadcast_to(
        jnp.reshape(jnp.asarray(scale, jnp.float32), (-1,)), (A,))
    biases = biases.at[3, 0:A].set(scale_vec)

    # Trace-time specialization: drop the multiply when scale == 1 exactly.
    try:
        apply_scale = bool(np.any(np.asarray(jax.device_get(scale_vec)) != 1.0))
    except Exception:
        apply_scale = True   # traced / unknown scale -> keep the multiply

    layout = dict(sd=sd, gd=gd, P=P, H=H, HP=HP, A=A, r_w2=r_w2, r_w3=r_w3,
                  n_rows=n_rows, apply_scale=apply_scale, use_tanh=use_tanh)
    return slab, biases, layout


def pack_obs(x, g):
    """One-time pack of (x, g) into the lane-contiguous (B, sd+gd) obs layout.

    In a full RL step the producer should emit this layout directly so no
    per-call concat/HBM round trip is needed.
    """
    return jnp.concatenate([x.astype(jnp.float32), g.astype(jnp.float32)],
                           axis=1)


# ----------------------------------------------------------------------------
# Wrapper
# ----------------------------------------------------------------------------
def _choose_tiling(B, tile_b):
    """Padding-aware batch tiling.

    Small B: one full-extent block (no padding, grid of 1).
    Large B: even number of steps (keeps both v7x TensorCores busy under
    dimension_semantics=('parallel',)); TB = pad8(ceil(B/n)) so padding is
    < 8 rows per step instead of blowing up to the tile size.
    """
    if B <= 256:
        return B, B, 1
    n = max(2, pl.cdiv(B, tile_b))
    n += n % 2
    TB = _pad8(pl.cdiv(B, n))
    return TB, TB * n, n


def controller_actor_forward(obs, slab, biases, layout, *, tile_b=2048):
    """obs: (B, sd+gd) packed [x|g] -> (B, action_dim) float32."""
    B, P = obs.shape
    assert P == layout["P"]
    A, H = layout["A"], layout["H"]
    n_rows = layout["n_rows"]

    TB, Bp, n_steps = _choose_tiling(B, tile_b)
    if Bp != B:
        obs = jnp.pad(obs, ((0, Bp - B), (0, 0)))

    kernel = _make_kernel(P, layout["HP"], layout["r_w2"], layout["r_w3"], A,
                          layout["apply_scale"], layout["use_tanh"])

    cost = pl.CostEstimate(
        flops=2 * B * (P * H + H * H + H * A),
        transcendentals=B * A if layout["use_tanh"] else 0,
        bytes_accessed=4 * (B * P + B * A) + 4 * slab.size + 4 * biases.size,
    )

    out = pl.pallas_call(
        kernel,
        out_shape=jax.ShapeDtypeStruct((Bp, A), jnp.float32),
        grid=(n_steps,),
        in_specs=[
            pl.BlockSpec((TB, P), lambda i: (i, 0)),
            # Constant block index -> parameter slab / biases stay resident.
            pl.BlockSpec((n_rows, _LANES), lambda i: (0, 0)),
            pl.BlockSpec((8, _LANES), lambda i: (0, 0)),
        ],
        out_specs=pl.BlockSpec((TB, A), lambda i: (i, 0)),
        compiler_params=pltpu.CompilerParams(
            dimension_semantics=("parallel",)),
        cost_estimate=cost,
    )(obs, slab, biases)

    # Only a tiny (B, A) row slice when the batch was padded; the old
    # (Bp, 128) lane slice pass is gone.
    return out if Bp == B else out[:B]


# ----------------------------------------------------------------------------
# Reference / init
# ----------------------------------------------------------------------------
def init_params(key, state_dim, goal_dim, action_dim, hidden_size=_HIDDEN,
                scale=1.0):
    """Synthetic init mimicking nn.Linear's U(-1/sqrt(fan_in), +) ranges.

    Weights stored as (in_features, out_features), i.e. pre-transposed vs
    PyTorch, so the kernel computes x @ W on the MXU.
    """
    in_dim = state_dim + goal_dim
    k1, k2, k3, k4, k5, k6 = jax.random.split(key, 6)

    def unif(k, shape, fan_in):
        bound = 1.0 / jnp.sqrt(jnp.float32(fan_in))
        return jax.random.uniform(k, shape, jnp.float32, -bound, bound)

    w1 = unif(k1, (in_dim, hidden_size), in_dim)
    b1 = unif(k2, (hidden_size,), in_dim)
    w2 = unif(k3, (hidden_size, hidden_size), hidden_size)
    b2 = unif(k4, (hidden_size,), hidden_size)
    w3 = unif(k5, (hidden_size, action_dim), hidden_size)
    b3 = unif(k6, (action_dim,), hidden_size)
    return (w1, b1, w2, b2, w3, b3, jnp.float32(scale))


def _reference_forward(x, g, params):
    """Pure-JAX reference (matches ControllerActor.forward, use_tanh=True)."""
    w1, b1, w2, b2, w3, b3, scale = params
    xg = jnp.concatenate([x, g], axis=1)
    h1 = jax.nn.relu(xg @ w1 + b1)
    h2 = jax.nn.relu(h1 @ w2 + b2)
    a = jnp.tanh(h2 @ w3 + b3)
    return jnp.asarray(scale) * a


if __name__ == "__main__":
    # Small shapes consistent with the module: batch=2, state_dim=16,
    # goal_dim=8, action_dim=4, hidden=20 (fixed by Actor).
    B, state_dim, goal_dim, action_dim = 2, 16, 8, 4

    key = jax.random.PRNGKey(0)
    kx, kg, kp = jax.random.split(key, 3)
    x = jax.random.normal(kx, (B, state_dim), jnp.float32)
    g = jax.random.normal(kg, (B, goal_dim), jnp.float32)
    params = init_params(kp, state_dim, goal_dim, action_dim, scale=1.0)

    # --- tiny batch: single full-extent block; scale==1 specialized away ---
    slab, biases, layout = pack_params(params, state_dim, goal_dim)
    assert layout["apply_scale"] is False
    out = jax.block_until_ready(
        controller_actor_forward(pack_obs(x, g), slab, biases, layout))
    ref = _reference_forward(x, g, params)
    assert out.shape == (B, action_dim)
    assert jnp.allclose(out, ref, atol=1e-5, rtol=1e-5)

    # --- batched path: B=300 -> even 2-step grid of 152-row tiles ---
    Bb = 300
    xb = jax.random.normal(kx, (Bb, state_dim), jnp.float32)
    gb = jax.random.normal(kg, (Bb, goal_dim), jnp.float32)
    outb = jax.block_until_ready(
        controller_actor_forward(pack_obs(xb, gb), slab, biases, layout))
    refb = _reference_forward(xb, gb, params)
    assert outb.shape == (Bb, action_dim)
    assert jnp.allclose(outb, refb, atol=1e-5, rtol=1e-5)

    # --- non-unit scale exercises the in-kernel scale multiply ---
    params_s = params[:-1] + (jnp.float32(0.5),)
    slab_s, biases_s, layout_s = pack_params(params_s, state_dim, goal_dim)
    assert layout_s["apply_scale"] is True
    outs = jax.block_until_ready(
        controller_actor_forward(pack_obs(xb, gb), slab_s, biases_s, layout_s))
    refs = _reference_forward(xb, gb, params_s)
    assert jnp.allclose(outs, refs, atol=1e-5, rtol=1e-5)

    print("KERNEL_OK")
</pallas_src>

<mosaic_0001>
module attributes {stable_mosaic.version = 11 : i64} {
  func.func @kernel(%arg0: i32, %arg1: memref<2x24xf32, #tpu.memory_space<vmem>>, %arg2: memref<72x128xf32, #tpu.memory_space<vmem>>, %arg3: memref<8x128xf32, #tpu.memory_space<vmem>>, %arg4: memref<2x4xf32, #tpu.memory_space<vmem>>) attributes {dimension_semantics = [#tpu.dimension_semantics<parallel>], iteration_bounds = array<i64: 1>, scalar_prefetch = 0 : i64, scratch_operands = 0 : i64, tpu.core_type = #tpu.core_type<tc>, window_params = [{transform_indices = @transform_0, window_bounds = array<i64: 2, 24>}, {pipeline_mode = #tpu.pipeline_mode<synchronous>, transform_indices = @transform_1, window_bounds = array<i64: 72, 128>}, {pipeline_mode = #tpu.pipeline_mode<synchronous>, transform_indices = @transform_2, window_bounds = array<i64: 8, 128>}, {transform_indices = @transform_3, window_bounds = array<i64: 2, 4>}]} {
    %c0 = arith.constant 0 : index
    %c0_0 = arith.constant 0 : index
    %0 = vector.load %arg2[%c0, %c0_0] : memref<72x128xf32, #tpu.memory_space<vmem>>, vector<24x128xf32>
    %c24 = arith.constant 24 : index
    %c0_1 = arith.constant 0 : index
    %1 = vector.load %arg2[%c24, %c0_1] : memref<72x128xf32, #tpu.memory_space<vmem>>, vector<24x128xf32>
    %c48 = arith.constant 48 : index
    %c0_2 = arith.constant 0 : index
    %2 = vector.load %arg2[%c48, %c0_2] : memref<72x128xf32, #tpu.memory_space<vmem>>, vector<24x128xf32>
    %c0_3 = arith.constant 0 : index
    %c0_4 = arith.constant 0 : index
    %3 = vector.load %arg3[%c0_3, %c0_4] : memref<8x128xf32, #tpu.memory_space<vmem>>, vector<1x128xf32>
    %c1 = arith.constant 1 : index
    %c0_5 = arith.constant 0 : index
    %4 = vector.load %arg3[%c1, %c0_5] : memref<8x128xf32, #tpu.memory_space<vmem>>, vector<1x128xf32>
    %c2 = arith.constant 2 : index
    %c0_6 = arith.constant 0 : index
    %5 = vector.load %arg3[%c2, %c0_6] : memref<8x128xf32, #tpu.memory_space<vmem>>, vector<1x128xf32>
    %c0_7 = arith.constant 0 : index
    %c0_8 = arith.constant 0 : index
    %6 = vector.load %arg1[%c0_7, %c0_8] : memref<2x24xf32, #tpu.memory_space<vmem>>, vector<2x24xf32>
    %cst = arith.constant dense<0.000000e+00> : vector<2x128xf32>
    %7 = tpu.matmul %6, %0, %cst {dimension_numbers = #tpu.dot_dimension_numbers<[1], [0], [0], [1], [0, 0, 1, 1], [], []>} : vector<2x24xf32>, vector<24x128xf32>, vector<2x128xf32> -> vector<2x128xf32>
    %8 = vector.broadcast %3 : vector<1x128xf32> to vector<2x128xf32>
    %9 = arith.addf %7, %8 : vector<2x128xf32>
    %cst_9 = arith.constant 0.000000e+00 : f32
    %10 = vector.broadcast %cst_9 : f32 to vector<2x128xf32>
    %11 = arith.maximumf %9, %10 : vector<2x128xf32>
    %12 = vector.extract_strided_slice %11 {offsets = [0, 0], sizes = [2, 24], strides = [1, 1]} : vector<2x128xf32> to vector<2x24xf32>
    %cst_10 = arith.constant dense<0.000000e+00> : vector<2x128xf32>
    %13 = tpu.matmul %12, %1, %cst_10 {dimension_numbers = #tpu.dot_dimension_numbers<[1], [0], [0], [1], [0, 0, 1, 1], [], []>} : vector<2x24xf32>, vector<24x128xf32>, vector<2x128xf32> -> vector<2x128xf32>
    %14 = vector.broadcast %4 : vector<1x128xf32> to vector<2x128xf32>
    %15 = arith.addf %13, %14 : vector<2x128xf32>
    %cst_11 = arith.constant 0.000000e+00 : f32
    %16 = vector.broadcast %cst_11 : f32 to vector<2x128xf32>
    %17 = arith.maximumf %15, %16 : vector<2x128xf32>
    %18 = vector.extract_strided_slice %17 {offsets = [0, 0], sizes = [2, 24], strides = [1, 1]} : vector<2x128xf32> to vector<2x24xf32>
    %cst_12 = arith.constant dense<0.000000e+00> : vector<2x128xf32>
    %19 = tpu.matmul %18, %2, %cst_12 {dimension_numbers = #tpu.dot_dimension_numbers<[1], [0], [0], [1], [0, 0, 1, 1], [], []>} : vector<2x24xf32>, vector<24x128xf32>, vector<2x128xf32> -> vector<2x128xf32>
    %20 = vector.broadcast %5 : vector<1x128xf32> to vector<2x128xf32>
    %21 = arith.addf %19, %20 : vector<2x128xf32>
    %22 = vector.extract_strided_slice %21 {offsets = [0, 0], sizes = [2, 4], strides = [1, 1]} : vector<2x128xf32> to vector<2x4xf32>
    %23 = math.tanh %22 : vector<2x4xf32>
    %c0_13 = arith.constant 0 : index
    %c0_14 = arith.constant 0 : index
    %24 = vector.load %arg4[%c0_13, %c0_14] : memref<2x4xf32, #tpu.memory_space<vmem>>, vector<2x4xf32>
    tpu.vector_store %arg4[%c0_13, %c0_14], %23 {strides = array<i32>} : memref<2x4xf32, #tpu.memory_space<vmem>>, vector<2x4xf32>,
    return
  }
  func.func @transform_0(%arg0: i32) -> (i32, i32) {
    %c0_i32 = arith.constant 0 : i32
    %c0_i32_0 = arith.constant 0 : i32
    return %arg0, %c0_i32 : i32, i32
  }
  func.func @transform_1(%arg0: i32) -> (i32, i32) {
    %c0_i32 = arith.constant 0 : i32
    %c0_i32_0 = arith.constant 0 : i32
    %c0_i32_1 = arith.constant 0 : i32
    return %c0_i32, %c0_i32_0 : i32, i32
  }
  func.func @transform_2(%arg0: i32) -> (i32, i32) {
    %c0_i32 = arith.constant 0 : i32
    %c0_i32_0 = arith.constant 0 : i32
    %c0_i32_1 = arith.constant 0 : i32
    return %c0_i32, %c0_i32_0 : i32, i32
  }
  func.func @transform_3(%arg0: i32) -> (i32, i32) {
    %c0_i32 = arith.constant 0 : i32
    %c0_i32_0 = arith.constant 0 : i32
    return %arg0, %c0_i32 : i32, i32
  }
}

</mosaic_0001>

<llo_original>
// kernel: tpu_custom_call.1
$region0: #{tpu_custom_call.1}
  #allocation0 [shape = 'u32[]', space=smem, size = 0x4, offset = 0x4, fixed_abs, tag = 'smem constant byte address 0x4 - core index']
  #allocation1 [shape = 'u32[72,128]{1,0:T(1,128)}', space=vmem, size = 0x9000, scoped, tag = 'internal scratch']
  %s0 = inlined_call_operand.hbm [shape: f32[2,24], index: 0, kind: input, shape index: {}]
  %s1 = inlined_call_operand.hbm [shape: f32[72,128], index: 1, kind: input, shape index: {}]
  %s2 = inlined_call_operand.hbm [shape: f32[8,128], index: 2, kind: input, shape index: {}]
  %s3 = inlined_call_operand.hbm [shape: f32[2,4], index: 3, kind: output, shape index: {}]
  %s4 = sld [smem:[#allocation0]]
  $region34: #{tpu_custom_call.1} parent=0
    _
  %s6 = ssub.s32 1, %s4
  %s7 = scalar_select 0, %s6, %s4
  $region1: #{tpu_custom_call.1} parent=0
    #allocation2 [shape = 'u8[1024]{0}', space=vmem, size = 0x400, scoped, tag = 'input window, operand 0, single buffered']
    #allocation3 [shape = 's32[1]{0}', space=sflag, size = 0x4, scoped, tag = 'scoped memory for tpu_custom_call.1']
    #allocation4 [shape = 's32[1]{0}', space=sflag, size = 0x4, scoped, tag = 'scoped memory for tpu_custom_call.1']
    #allocation5 [shape = 'u8[36864]{0}', space=vmem, size = 0x9000, scoped, tag = 'input window, operand 1, single buffered']
    #allocation6 [shape = 's32[1]{0}', space=sflag, size = 0x4, scoped, tag = 'scoped memory for tpu_custom_call.1']
    #allocation7 [shape = 'u8[4096]{0}', space=vmem, size = 0x1000, scoped, tag = 'input window, operand 2, single buffered']
    #allocation8 [shape = 'u8[1024]{0}', space=vmem, size = 0x400, scoped, tag = 'output window, operand 0, single buffered']
    %8 = vsyncpa [#allocation3], 0
    %9 = vsyncpa [#allocation6], 0
    %10 = vsyncpa [#allocation4], 0
    // Predicated region
    $region2: #{tpu_custom_call.1} parent=1 // pred_check
      _
    $region3: #{tpu_custom_call.1} parent=1 // pred_check_branch
      %12 = sbr.rel (0) target = $region5
    $region4: #{tpu_custom_call.1} parent=1 // pred_region
      %14 = vsyncadd [#allocation3], 0
      %s16 = sshll.u32 %s0, 4
      %s17 = int_to_ptr.hbm [resolvable:$true] %s16
      %s18 = sshll.u32 [#allocation2], 4
      %s19 = int_to_ptr.vmem [resolvable:$true] %s18
      %21 = dma.hbm_to_vmem [thread:$0]  %s17, 32, %s19, [#allocation3]
    $region5: #{tpu_custom_call.1} parent=1 // pred_fallthru
      _
    // Predicated region
    $region6: #{tpu_custom_call.1} parent=1 // pred_check
      _
    $region7: #{tpu_custom_call.1} parent=1 // pred_check_branch
      %23 = sbr.rel (0) target = $region9
    $region8: #{tpu_custom_call.1} parent=1 // pred_region
      %25 = vsyncadd [#allocation6], 0
      %s26 = sshll.u32 %s1, 4
      %s27 = int_to_ptr.hbm [resolvable:$true] %s26
      %s28 = sshll.u32 [#allocation5], 4
      %s29 = int_to_ptr.vmem [resolvable:$true] %s28
      %34 = dma.hbm_to_vmem [thread:$0]  %s27, 1152, %s29, [#allocation6], 128, 128, 8
    $region9: #{tpu_custom_call.1} parent=1 // pred_fallthru
      _
    // Predicated region
    $region10: #{tpu_custom_call.1} parent=1 // pred_check
      _
    $region11: #{tpu_custom_call.1} parent=1 // pred_check_branch
      %36 = sbr.rel (0) target = $region13
    $region12: #{tpu_custom_call.1} parent=1 // pred_region
      %38 = vsyncadd [#allocation6], 0
      %s40 = sshll.u32 %s2, 4
      %s41 = int_to_ptr.hbm [resolvable:$true] %s40
      %s42 = sshll.u32 [#allocation7], 4
      %s43 = int_to_ptr.vmem [resolvable:$true] %s42
      %45 = dma.hbm_to_vmem [thread:$0]  %s41, 128, %s43, [#allocation6]
    $region13: #{tpu_custom_call.1} parent=1 // pred_fallthru
      _
    // Predicated region
    $region14: #{tpu_custom_call.1} parent=1 // pred_check
      _
    $region15: #{tpu_custom_call.1} parent=1 // pred_check_branch
      %47 = sbr.rel (0) target = $region17
    $region16: #{tpu_custom_call.1} parent=1 // pred_region
      %49 = dma.done [#allocation3], 32
    $region17: #{tpu_custom_call.1} parent=1 // pred_fallthru
      _
    // Predicated region
    $region18: #{tpu_custom_call.1} parent=1 // pred_check
      _
    $region19: #{tpu_custom_call.1} parent=1 // pred_check_branch
      %51 = sbr.rel (0) target = $region21
    $region20: #{tpu_custom_call.1} parent=1 // pred_region
      %53 = dma.done [#allocation6], 1152
    $region21: #{tpu_custom_call.1} parent=1 // pred_fallthru
      _
    // Predicated region
    $region22: #{tpu_custom_call.1} parent=1 // pred_check
      _
    $region23: #{tpu_custom_call.1} parent=1 // pred_check_branch
      %55 = sbr.rel (0) target = $region25
    $region24: #{tpu_custom_call.1} parent=1 // pred_region
      %57 = dma.done [#allocation6], 128
    $region25: #{tpu_custom_call.1} parent=1 // pred_fallthru
      _
    %v58 = vld [vmem:[#allocation5] sm:$0xff]
    %v59 = vld [vmem:[#allocation5 + $0x8] sm:$0xff]
    %v60 = vld [vmem:[#allocation5 + $0x10] sm:$0xff]
    %v61 = vld [vmem:[#allocation5 + $0x18] sm:$0xff]
    %v62 = vld [vmem:[#allocation5 + $0x20] sm:$0xff]
    %v63 = vld [vmem:[#allocation5 + $0x28] sm:$0xff]
    %v64 = vld [vmem:[#allocation5 + $0x30] sm:$0xff]
    %v65 = vld [vmem:[#allocation5 + $0x38] sm:$0xff]
    %v66 = vld [vmem:[#allocation5 + $0x40] sm:$0xff]
    %v67 = vld [vmem:[#allocation7] sm:$0x1]
    %v68 = vld [vmem:[#allocation7 + $0x1] sm:$0x1]
    %v69 = vld [vmem:[#allocation7 + $0x2] sm:$0x1]
    %v70 = vld [vmem:[#allocation2] sm:$0x3]
    %v71 = vperm.slane %v67, 0
    %vm72 = vcmask 195584
    %v74 = vsel %vm72, %v70, 0
    %76 = vmatpush.msra.mxu0 0.0
    %77 = vmatpush.msra.mxu0 0.0
    %78 = vmatpush.msra.mxu0 0.0
    %79 = vmatpush.msra.mxu0 0.0
    %80 = vmatpush.msra.mxu0 0.0
    %81 = vmatpush.msra.mxu0 0.0
    %82 = vmatpush.msra.mxu0 0.0
    %83 = vmatpush.msra.mxu0 0.0
    %84 = vmatpush.msra.mxu0 0.0
    %85 = vmatpush.msra.mxu0 0.0
    %86 = vmatpush.msra.mxu0 0.0
    %87 = vmatpush.msra.mxu0 0.0
    %88 = vmatpush.msra.mxu0 0.0
    %89 = vmatpush.msra.mxu0 %v60
    %90 = vmatpush.msra.mxu0 %v59
    %91 = vmatpush.msra.mxu0 %v58
    %92 = vmatmul.f32.gmra.mxu0 %v74
    %v93 = vpop.f32.mrf.mxu0
    %v94 = vadd.f32 %v71, %v93
    %95 = vdwg.mxu0
    %v96 = vmax.f32 %v94, 0.0
    %v97 = vperm.slane %v68, 0
    %v99 = vsel %vm72, %v96, 0
    %101 = vmatpush.msra.mxu0 0.0
    %102 = vmatpush.msra.mxu0 0.0
    %103 = vmatpush.msra.mxu0 0.0
    %104 = vmatpush.msra.mxu0 0.0
    %105 = vmatpush.msra.mxu0 0.0
    %106 = vmatpush.msra.mxu0 0.0
    %107 = vmatpush.msra.mxu0 0.0
    %108 = vmatpush.msra.mxu0 0.0
    %109 = vmatpush.msra.mxu0 0.0
    %110 = vmatpush.msra.mxu0 0.0
    %111 = vmatpush.msra.mxu0 0.0
    %112 = vmatpush.msra.mxu0 0.0
    %113 = vmatpush.msra.mxu0 0.0
    %114 = vmatpush.msra.mxu0 %v63
    %115 = vmatpush.msra.mxu0 %v62
    %116 = vmatpush.msra.mxu0 %v61
    %117 = vmatmul.f32.gmra.mxu0 %v99
    %v118 = vpop.f32.mrf.mxu0
    %v119 = vadd.f32 %v97, %v118
    %120 = vdwg.mxu0
    %v121 = vmax.f32 %v119, 0.0
    %v122 = vperm.slane %v69, 0
    %v124 = vsel %vm72, %v121, 0
    %126 = vmatpush.msra.mxu0 0.0
    %127 = vmatpush.msra.mxu0 0.0
    %128 = vmatpush.msra.mxu0 0.0
    %129 = vmatpush.msra.mxu0 0.0
    %130 = vmatpush.msra.mxu0 0.0
    %131 = vmatpush.msra.mxu0 0.0
    %132 = vmatpush.msra.mxu0 0.0
    %133 = vmatpush.msra.mxu0 0.0
    %134 = vmatpush.msra.mxu0 0.0
    %135 = vmatpush.msra.mxu0 0.0
    %136 = vmatpush.msra.mxu0 0.0
    %137 = vmatpush.msra.mxu0 0.0
    %138 = vmatpush.msra.mxu0 0.0
    %139 = vmatpush.msra.mxu0 %v66
    %140 = vmatpush.msra.mxu0 %v65
    %141 = vmatpush.msra.mxu0 %v64
    %142 = vmatmul.f32.gmra.mxu0 %v124
    %v143 = vpop.f32.mrf.mxu0
    %v144 = vadd.f32 %v122, %v143
    %145 = vdwg.mxu0
    %v146 = vtanh.pop %v144
    %vm147 = vcmask 25600
    %148 = vst.msk [vmem:[#allocation8] sm:$0x3] %vm147, %v146
    // Predicated region
    $region26: #{tpu_custom_call.1} parent=1 // pred_check
      _
    $region27: #{tpu_custom_call.1} parent=1 // pred_check_branch
      %150 = sbr.rel (0) target = $region29
    $region28: #{tpu_custom_call.1} parent=1 // pred_region
      %152 = vsyncadd [#allocation4], 0
      %s154 = sshll.u32 [#allocation8], 4
      %s155 = int_to_ptr.vmem [resolvable:$true] %s154
      %s156 = sshll.u32 %s3, 4
      %s157 = int_to_ptr.hbm [resolvable:$true] %s156
      %159 = dma.vmem_to_hbm [thread:$0]  %s155, 32, %s157, [#allocation4]
    $region29: #{tpu_custom_call.1} parent=1 // pred_fallthru
      _
    // Predicated region
    $region30: #{tpu_custom_call.1} parent=1 // pred_check
      _
    $region31: #{tpu_custom_call.1} parent=1 // pred_check_branch
      %161 = sbr.rel (0) target = $region33
    $region32: #{tpu_custom_call.1} parent=1 // pred_region
      %163 = dma.done [#allocation4], 32
    $region33: #{tpu_custom_call.1} parent=1 // pred_fallthru
      _
    %164 = vsyncpa [#allocation3], 1
    %165 = vsyncpa [#allocation6], 1
    %166 = vsyncpa [#allocation4], 1

</llo_original>
